<compile_context>
chip_gen: v5e
topology: v5e:2x2
jax: 0.10.0
libtpu: 0.0.40
codegen_flags: <defaults>
</compile_context>

<pallas_src>
import functools

import jax
import jax.numpy as jnp
from jax import lax
from jax.experimental import pallas as pl
from jax.experimental.pallas import tpu as pltpu


def _round_up(x, m):
    return (x + m - 1) // m * m


def _vmem_budget_bytes():
    """Per-generation VMEM budget (v5e/v6e: 128 MiB phys -> 96 MiB; v7x: 64 -> 48)."""
    phys = 64 * 1024 * 1024
    try:
        info = pltpu.get_tpu_info()
        phys = int(getattr(info, "vmem_capacity_bytes", phys))
    except Exception:
        pass
    return max(32 * 1024 * 1024, min(phys * 3 // 4, 100 * 1024 * 1024))


def _slab_kernel(x_ref, w_ref, o_ref, slab_ref, sum_ref, sq_ref, *,
                 s_tile, s_valid, inv_count, eps, mask_tail):
    """Single streaming pass: conv tile -> stats + VMEM y-slab; normalize at the end.

    x_ref:    (C_in, s_tile)   current spatial tile of one batch element
    w_ref:    (C_out, C_in)    resident 1x1x1 conv weight
    o_ref:    (C_out, S)       per-batch output block (resident across the t axis)
    slab_ref: (C_out, S_pad)   f32 scratch holding the raw conv outputs
    sum_ref / sq_ref: (C_out, 1) f32 running sum / sum-of-squares
    """
    t = pl.program_id(1)
    n_t = pl.num_programs(1)

    @pl.when(t == 0)
    def _():
        sum_ref[...] = jnp.zeros_like(sum_ref)
        sq_ref[...] = jnp.zeros_like(sq_ref)

    # 1x1x1 Conv3d == channel matmul; f32 accumulation on the MXU.
    y = jnp.dot(w_ref[...], x_ref[...], preferred_element_type=jnp.float32)

    if mask_tail:
        # The last tile reads past the end of x (Pallas pads the block with
        # unspecified values); zero those columns so the statistics are exact.
        col = lax.broadcasted_iota(jnp.int32, y.shape, 1) + t * s_tile
        y = jnp.where(col < s_valid, y, 0.0)

    sum_ref[...] += jnp.sum(y, axis=-1, keepdims=True)
    sq_ref[...] += jnp.sum(y * y, axis=-1, keepdims=True)

    start = pl.multiple_of(t * s_tile, 128)
    slab_ref[:, pl.ds(start, s_tile)] = y

    @pl.when(t == n_t - 1)
    def _():
        # InstanceNorm3d (affine=False, eps=1e-5, biased variance) folded into
        # a per-channel scale/shift, then ReLU, applied to the resident slab.
        mean = sum_ref[...] * inv_count
        var = jnp.maximum(sq_ref[...] * inv_count - mean * mean, 0.0)
        scale = lax.rsqrt(var + eps)
        shift = -mean * scale
        yn = slab_ref[...] * scale + shift
        o_ref[...] = jnp.maximum(yn[:, :s_valid], 0.0).astype(o_ref.dtype)


def _twopass_kernel(x_ref, w_ref, o_ref, sum_ref, sq_ref, *,
                    s_tile, s_valid, inv_count, eps, mask_tail):
    """Fallback when the per-batch y-slab does not fit the VMEM budget.

    Pass 0 streams x and accumulates sum / sum-of-squares; pass 1 recomputes y
    per tile and applies the folded (hoisted) per-channel scale/shift + ReLU.
    """
    p = pl.program_id(1)   # 0 = stats pass, 1 = write pass
    s = pl.program_id(2)   # spatial tile index

    @pl.when(jnp.logical_and(p == 0, s == 0))
    def _():
        sum_ref[...] = jnp.zeros_like(sum_ref)
        sq_ref[...] = jnp.zeros_like(sq_ref)

    y = jnp.dot(w_ref[...], x_ref[...], preferred_element_type=jnp.float32)

    @pl.when(p == 0)
    def _():
        yy = y
        if mask_tail:
            col = lax.broadcasted_iota(jnp.int32, y.shape, 1) + s * s_tile
            yy = jnp.where(col < s_valid, y, 0.0)
        sum_ref[...] += jnp.sum(yy, axis=-1, keepdims=True)
        sq_ref[...] += jnp.sum(yy * yy, axis=-1, keepdims=True)

    @pl.when(jnp.logical_and(p == 1, s == 0))
    def _():
        # Hoisted once per batch element: fold mean/var into scale/shift,
        # reusing the stats scratch in place (sum_ref <- scale, sq_ref <- shift).
        mean = sum_ref[...] * inv_count
        var = jnp.maximum(sq_ref[...] * inv_count - mean * mean, 0.0)
        scale = lax.rsqrt(var + eps)
        sum_ref[...] = scale
        sq_ref[...] = -mean * scale

    @pl.when(p == 1)
    def _():
        # Ragged-tail columns hold garbage but their store is OOB and masked
        # off by Pallas; valid columns are exact (per-column independence).
        o_ref[...] = jnp.maximum(y * sum_ref[...] + sq_ref[...], 0.0).astype(o_ref.dtype)


def out_conv(x_ncdhw, weight, bias=None, *, s_tile=None, force_two_pass=False):
    """Conv3d(k=1, stride=1) -> InstanceNorm3d(affine=False) -> ReLU.

    x_ncdhw: (N, C_in, D, H, W); weight: (C_out, C_in); bias: (C_out,) or None.
    The conv bias is accepted for API parity but intentionally unused: the
    following InstanceNorm3d (affine=False) subtracts the per-channel mean, so
    a per-channel bias added before it cancels exactly and leaves the variance
    unchanged.
    """
    del bias  # cancelled exactly by InstanceNorm's mean subtraction

    N, C_in, D, H, W = x_ncdhw.shape
    C_out = weight.shape[0]
    S = D * H * W
    out_dtype = x_ncdhw.dtype
    in_bytes = jnp.dtype(x_ncdhw.dtype).itemsize
    out_bytes = jnp.dtype(out_dtype).itemsize

    vmem_budget = _vmem_budget_bytes()

    # --- Spatial tile sizing: lane-dense (128-aligned) tiles sized from C_in
    # and the VMEM budget (tiny C_in with a small fixed tile leaves the kernel
    # grid-overhead bound), capped at the padded full spatial extent.
    s_cap = _round_up(S, 128)
    if s_tile is None:
        target_block_bytes = 4 << 20  # ~4 MiB of x per grid step
        s_tile = _round_up(max(target_block_bytes // (in_bytes * C_in), 128), 128)
    else:
        s_tile = _round_up(max(int(s_tile), 128), 128)
    s_tile = min(s_tile, s_cap)

    def _streaming_bytes(st):
        return (2 * C_in * st * in_bytes          # double-buffered x tiles
                + 2 * C_out * C_in * in_bytes     # resident weight
                + 2 * C_out * st * out_bytes)     # double-buffered out tiles
    while s_tile > 128 and _streaming_bytes(s_tile) > vmem_budget // 2:
        s_tile -= 128

    T = -(-S // s_tile)
    S_pad = T * s_tile
    mask_tail = S_pad != S

    x_flat = x_ncdhw.reshape(N, C_in, S)   # pure metadata reshape, no copy / pad

    # --- Single-pass slab variant: keep the whole per-batch conv output
    # resident in VMEM so x is read exactly once (HBM traffic C_in*S + C_out*S
    # instead of 2*C_in*S + C_out*S) and the second MXU sweep disappears.
    slab_fits = (C_out * S_pad * 4                              # f32 y-slab scratch
                 + 2 * C_out * _round_up(S, 128) * out_bytes    # out block (dbl-buffered)
                 + 2 * C_in * s_tile * in_bytes                 # x tiles (dbl-buffered)
                 + 2 * C_out * C_in * in_bytes                  # weight
                 + (1 << 20)) <= vmem_budget                    # headroom
    use_slab = slab_fits and not force_two_pass

    compiler_params = pltpu.CompilerParams(
        dimension_semantics=("parallel",) + ("arbitrary",) * (1 if use_slab else 2),
        vmem_limit_bytes=vmem_budget,
    )
    # TODO(synk): for v7x with N == 1, additionally split S into a leading
    # "parallel" chunk axis (per-core partial stats + tiny combine) so both
    # TensorCores engage; with only N marked parallel one core idles at N=1.

    if use_slab:
        kernel = functools.partial(
            _slab_kernel, s_tile=s_tile, s_valid=S, inv_count=1.0 / S,
            eps=1e-5, mask_tail=mask_tail)
        out_flat = pl.pallas_call(
            kernel,
            out_shape=jax.ShapeDtypeStruct((N, C_out, S), out_dtype),
            grid_spec=pltpu.PrefetchScalarGridSpec(
                num_scalar_prefetch=0,
                grid=(N, T),
                in_specs=[
                    # batch dim squeezed -> kernel sees (C_in, s_tile)
                    pl.BlockSpec((None, C_in, s_tile), lambda n, t: (n, 0, t)),
                    # tiny weight block, constant index -> fetched once, resident
                    pl.BlockSpec((C_out, C_in), lambda n, t: (0, 0)),
                ],
                # Full per-batch output block: resident across the t axis,
                # written once (normalized) at the last tile, flushed to HBM
                # when the batch index advances / at grid end.
                out_specs=pl.BlockSpec((None, C_out, S), lambda n, t: (n, 0, 0)),
                scratch_shapes=[
                    pltpu.VMEM((C_out, S_pad), jnp.float32),  # raw conv slab
                    pltpu.VMEM((C_out, 1), jnp.float32),      # sum(y)
                    pltpu.VMEM((C_out, 1), jnp.float32),      # sum(y*y)
                ],
            ),
            compiler_params=compiler_params,
        )(x_flat, weight)
    else:
        kernel = functools.partial(
            _twopass_kernel, s_tile=s_tile, s_valid=S, inv_count=1.0 / S,
            eps=1e-5, mask_tail=mask_tail)
        out_flat = pl.pallas_call(
            kernel,
            out_shape=jax.ShapeDtypeStruct((N, C_out, S), out_dtype),
            grid_spec=pltpu.PrefetchScalarGridSpec(
                num_scalar_prefetch=0,
                grid=(N, 2, T),
                in_specs=[
                    pl.BlockSpec((None, C_in, s_tile), lambda n, p, s: (n, 0, s)),
                    pl.BlockSpec((C_out, C_in), lambda n, p, s: (0, 0)),
                ],
                # During the stats pass (p=0) the output block index stays
                # pinned at tile 0, so no garbage writebacks occur mid-pass;
                # pass 1 writes every tile with the final normalized values.
                out_specs=pl.BlockSpec(
                    (None, C_out, s_tile), lambda n, p, s: (n, 0, s * p)),
                scratch_shapes=[
                    pltpu.VMEM((C_out, 1), jnp.float32),  # sum(y)   -> scale
                    pltpu.VMEM((C_out, 1), jnp.float32),  # sum(y*y) -> shift
                ],
            ),
            compiler_params=compiler_params,
        )(x_flat, weight)

    return out_flat.reshape(N, C_out, D, H, W)


def reference(x_ncdhw, weight, bias):
    # Pure-JAX reference of Conv3d(k=1) -> InstanceNorm3d -> ReLU
    y = jnp.einsum("oc,ncdhw->nodhw", weight, x_ncdhw)
    y = y + bias[None, :, None, None, None]
    mean = jnp.mean(y, axis=(2, 3, 4), keepdims=True)
    var = jnp.mean((y - mean) ** 2, axis=(2, 3, 4), keepdims=True)
    return jnp.maximum((y - mean) / jnp.sqrt(var + 1e-5), 0.0)


if __name__ == "__main__":
    key = jax.random.PRNGKey(0)
    kx, kw, kb = jax.random.split(key, 3)

    N, C_in, C_out = 2, 4, 3
    D, H, W = 6, 10, 10          # S = 600: not a multiple of 128 -> exercises tail masking

    x = jax.random.normal(kx, (N, C_in, D, H, W), dtype=jnp.float32)

    # Parameter init matching nn.Conv3d(in_ch, n_class, kernel_size=1):
    # weight (C_out, C_in, 1, 1, 1) collapsed to (C_out, C_in); bias (C_out,)
    fan_in = C_in  # * 1 * 1 * 1
    bound = 1.0 / (fan_in ** 0.5)
    weight = jax.random.uniform(kw, (C_out, C_in), jnp.float32, -bound, bound)
    bias = jax.random.uniform(kb, (C_out,), jnp.float32, -bound, bound)

    ref = reference(x, weight, bias)

    # Preferred single-pass slab path, auto-sized tile (single big tile here).
    out_slab = jax.block_until_ready(out_conv(x, weight, bias))
    # Single-pass path, forced small tile -> multi-tile streaming + ragged tail.
    out_slab_tiled = jax.block_until_ready(out_conv(x, weight, bias, s_tile=256))
    # Two-pass fallback path (used when the per-batch slab would not fit VMEM).
    out_two_pass = jax.block_until_ready(
        out_conv(x, weight, bias, s_tile=256, force_two_pass=True))

    for out in (out_slab, out_slab_tiled, out_two_pass):
        assert out.shape == ref.shape
        assert jnp.allclose(out, ref, atol=1e-4, rtol=1e-4), "mismatch vs reference"

    print("KERNEL_OK")
</pallas_src>

<mosaic_0001>
module attributes {stable_mosaic.version = 11 : i64} {
  func.func @_slab_kernel(%arg0: i32, %arg1: i32, %arg2: memref<1x4x640xf32, #tpu.memory_space<vmem>>, %arg3: memref<3x4xf32, #tpu.memory_space<vmem>>, %arg4: memref<1x3x600xf32, #tpu.memory_space<vmem>>, %arg5: memref<3x640xf32, #tpu.memory_space<vmem>>, %arg6: memref<3x1xf32, #tpu.memory_space<vmem>>, %arg7: memref<3x1xf32, #tpu.memory_space<vmem>>) attributes {dimension_semantics = [#tpu.dimension_semantics<parallel>, #tpu.dimension_semantics<arbitrary>], iteration_bounds = array<i64: 2, 1>, scalar_prefetch = 0 : i64, scratch_operands = 3 : i64, tpu.core_type = #tpu.core_type<tc>, window_params = [{transform_indices = @transform_0, window_bounds = array<i64: 1, 4, 640>}, {pipeline_mode = #tpu.pipeline_mode<synchronous>, transform_indices = @transform_1, window_bounds = array<i64: 3, 4>}, {transform_indices = @transform_2, window_bounds = array<i64: 1, 3, 600>}]} {
    %c0_i32 = arith.constant 0 : i32
    %0 = arith.cmpi eq, %arg1, %c0_i32 : i32
    %1 = arith.extui %0 : i1 to i32
    %c0_i32_0 = arith.constant 0 : i32
    %2 = arith.cmpi ne, %1, %c0_i32_0 : i32
    scf.if %2 {
      %cst_20 = arith.constant 0.000000e+00 : f32
      %33 = vector.broadcast %cst_20 : f32 to vector<3x1xf32>
      %c0_21 = arith.constant 0 : index
      %c0_22 = arith.constant 0 : index
      %34 = vector.load %arg6[%c0_21, %c0_22] : memref<3x1xf32, #tpu.memory_space<vmem>>, vector<3x1xf32>
      tpu.vector_store %arg6[%c0_21, %c0_22], %33 {strides = array<i32>} : memref<3x1xf32, #tpu.memory_space<vmem>>, vector<3x1xf32>,
      %cst_23 = arith.constant 0.000000e+00 : f32
      %35 = vector.broadcast %cst_23 : f32 to vector<3x1xf32>
      %c0_24 = arith.constant 0 : index
      %c0_25 = arith.constant 0 : index
      %36 = vector.load %arg7[%c0_24, %c0_25] : memref<3x1xf32, #tpu.memory_space<vmem>>, vector<3x1xf32>
      tpu.vector_store %arg7[%c0_24, %c0_25], %35 {strides = array<i32>} : memref<3x1xf32, #tpu.memory_space<vmem>>, vector<3x1xf32>,
    } else {
    }
    %c0 = arith.constant 0 : index
    %c0_1 = arith.constant 0 : index
    %3 = vector.load %arg3[%c0, %c0_1] : memref<3x4xf32, #tpu.memory_space<vmem>>, vector<3x4xf32>
    %c0_2 = arith.constant 0 : index
    %c0_3 = arith.constant 0 : index
    %c0_4 = arith.constant 0 : index
    %4 = vector.load %arg2[%c0_2, %c0_3, %c0_4] : memref<1x4x640xf32, #tpu.memory_space<vmem>>, vector<1x4x640xf32>
    %5 = vector.shape_cast %4 : vector<1x4x640xf32> to vector<4x640xf32>
    %cst = arith.constant dense<0.000000e+00> : vector<3x640xf32>
    %6 = tpu.matmul %3, %5, %cst {dimension_numbers = #tpu.dot_dimension_numbers<[1], [0], [0], [1], [0, 0, 1, 1], [], []>} : vector<3x4xf32>, vector<4x640xf32>, vector<3x640xf32> -> vector<3x640xf32>
    %7 = tpu.iota {dimensions = array<i32: 1>} : vector<3x640xi32>
    %c640_i32 = arith.constant 640 : i32
    %8 = arith.muli %arg1, %c640_i32 : i32
    %9 = vector.broadcast %8 : i32 to vector<3x640xi32>
    %10 = arith.addi %7, %9 : vector<3x640xi32>
    %c600_i32 = arith.constant 600 : i32
    %11 = vector.broadcast %c600_i32 : i32 to vector<3x640xi32>
    %12 = arith.cmpi slt, %10, %11 : vector<3x640xi32>
    %cst_5 = arith.constant 0.000000e+00 : f32
    %13 = vector.broadcast %cst_5 : f32 to vector<3x640xf32>
    %14 = arith.select %12, %6, %13 : vector<3x640xi1>, vector<3x640xf32>
    %c0_6 = arith.constant 0 : index
    %c0_7 = arith.constant 0 : index
    %15 = vector.load %arg6[%c0_6, %c0_7] : memref<3x1xf32, #tpu.memory_space<vmem>>, vector<3x1xf32>
    %cst_8 = arith.constant dense<0.000000e+00> : vector<3xf32>
    %16 = vector.multi_reduction <add>, %14, %cst_8 [1] : vector<3x640xf32> to vector<3xf32>
    %17 = vector.shape_cast %16 : vector<3xf32> to vector<3x1xf32>
    %18 = arith.addf %15, %17 : vector<3x1xf32>
    %c0_9 = arith.constant 0 : index
    %c0_10 = arith.constant 0 : index
    %19 = vector.load %arg6[%c0_9, %c0_10] : memref<3x1xf32, #tpu.memory_space<vmem>>, vector<3x1xf32>
    tpu.vector_store %arg6[%c0_9, %c0_10], %18 {strides = array<i32>} : memref<3x1xf32, #tpu.memory_space<vmem>>, vector<3x1xf32>,
    %c0_11 = arith.constant 0 : index
    %c0_12 = arith.constant 0 : index
    %20 = vector.load %arg7[%c0_11, %c0_12] : memref<3x1xf32, #tpu.memory_space<vmem>>, vector<3x1xf32>
    %21 = arith.mulf %14, %14 : vector<3x640xf32>
    %cst_13 = arith.constant dense<0.000000e+00> : vector<3xf32>
    %22 = vector.multi_reduction <add>, %21, %cst_13 [1] : vector<3x640xf32> to vector<3xf32>
    %23 = vector.shape_cast %22 : vector<3xf32> to vector<3x1xf32>
    %24 = arith.addf %20, %23 : vector<3x1xf32>
    %c0_14 = arith.constant 0 : index
    %c0_15 = arith.constant 0 : index
    %25 = vector.load %arg7[%c0_14, %c0_15] : memref<3x1xf32, #tpu.memory_space<vmem>>, vector<3x1xf32>
    tpu.vector_store %arg7[%c0_14, %c0_15], %24 {strides = array<i32>} : memref<3x1xf32, #tpu.memory_space<vmem>>, vector<3x1xf32>,
    %c640_i32_16 = arith.constant 640 : i32
    %26 = arith.muli %arg1, %c640_i32_16 : i32
    %27 = tpu.assume_multiple %26, 128 : i32
    %c0_17 = arith.constant 0 : index
    %28 = arith.index_cast %27 : i32 to index
    %29 = vector.load %arg5[%c0_17, %28] : memref<3x640xf32, #tpu.memory_space<vmem>>, vector<3x640xf32>
    tpu.vector_store %arg5[%c0_17, %28], %14 {strides = array<i32>} : memref<3x640xf32, #tpu.memory_space<vmem>>, vector<3x640xf32>,
    %c0_i32_18 = arith.constant 0 : i32
    %30 = arith.cmpi eq, %arg1, %c0_i32_18 : i32
    %31 = arith.extui %30 : i1 to i32
    %c0_i32_19 = arith.constant 0 : i32
    %32 = arith.cmpi ne, %31, %c0_i32_19 : i32
    scf.if %32 {
      %c0_20 = arith.constant 0 : index
      %c0_21 = arith.constant 0 : index
      %33 = vector.load %arg6[%c0_20, %c0_21] : memref<3x1xf32, #tpu.memory_space<vmem>>, vector<3x1xf32>
      %cst_22 = arith.constant 0.00166666671 : f32
      %34 = vector.broadcast %cst_22 : f32 to vector<3x1xf32>
      %35 = arith.mulf %33, %34 : vector<3x1xf32>
      %c0_23 = arith.constant 0 : index
      %c0_24 = arith.constant 0 : index
      %36 = vector.load %arg7[%c0_23, %c0_24] : memref<3x1xf32, #tpu.memory_space<vmem>>, vector<3x1xf32>
      %cst_25 = arith.constant 0.00166666671 : f32
      %37 = vector.broadcast %cst_25 : f32 to vector<3x1xf32>
      %38 = arith.mulf %36, %37 : vector<3x1xf32>
      %39 = arith.mulf %35, %35 : vector<3x1xf32>
      %40 = arith.subf %38, %39 : vector<3x1xf32>
      %cst_26 = arith.constant 0.000000e+00 : f32
      %41 = vector.broadcast %cst_26 : f32 to vector<3x1xf32>
      %42 = arith.maximumf %40, %41 : vector<3x1xf32>
      %cst_27 = arith.constant 9.99999974E-6 : f32
      %43 = vector.broadcast %cst_27 : f32 to vector<3x1xf32>
      %44 = arith.addf %42, %43 : vector<3x1xf32>
      %45 = math.rsqrt %44 : vector<3x1xf32>
      %cst_28 = arith.constant 0.000000e+00 : f32
      %46 = vector.broadcast %cst_28 : f32 to vector<3x1xf32>
      %47 = arith.subf %46, %35 : vector<3x1xf32>
      %48 = arith.mulf %47, %45 : vector<3x1xf32>
      %c0_29 = arith.constant 0 : index
      %c0_30 = arith.constant 0 : index
      %49 = vector.load %arg5[%c0_29, %c0_30] : memref<3x640xf32, #tpu.memory_space<vmem>>, vector<3x640xf32>
      %50 = vector.broadcast %45 : vector<3x1xf32> to vector<3x640xf32>
      %51 = arith.mulf %49, %50 : vector<3x640xf32>
      %52 = vector.broadcast %48 : vector<3x1xf32> to vector<3x640xf32>
      %53 = arith.addf %51, %52 : vector<3x640xf32>
      %54 = vector.extract_strided_slice %53 {offsets = [0, 0], sizes = [3, 600], strides = [1, 1]} : vector<3x640xf32> to vector<3x600xf32>
      %cst_31 = arith.constant 0.000000e+00 : f32
      %55 = vector.broadcast %cst_31 : f32 to vector<3x600xf32>
      %56 = arith.maximumf %54, %55 : vector<3x600xf32>
      %c0_32 = arith.constant 0 : index
      %c0_33 = arith.constant 0 : index
      %c0_34 = arith.constant 0 : index
      %57 = vector.load %arg4[%c0_32, %c0_33, %c0_34] : memref<1x3x600xf32, #tpu.memory_space<vmem>>, vector<1x3x600xf32>
      %58 = vector.shape_cast %57 : vector<1x3x600xf32> to vector<3x600xf32>
      %59 = vector.shape_cast %56 : vector<3x600xf32> to vector<1x3x600xf32>
      tpu.vector_store %arg4[%c0_32, %c0_33, %c0_34], %59 {strides = array<i32>} : memref<1x3x600xf32, #tpu.memory_space<vmem>>, vector<1x3x600xf32>,
    } else {
    }
    return
  }
  func.func @transform_0(%arg0: i32, %arg1: i32) -> (i32, i32, i32) {
    %c0_i32 = arith.constant 0 : i32
    %c0_i32_0 = arith.constant 0 : i32
    return %arg0, %c0_i32, %arg1 : i32, i32, i32
  }
  func.func @transform_1(%arg0: i32, %arg1: i32) -> (i32, i32) {
    %c0_i32 = arith.constant 0 : i32
    %c0_i32_0 = arith.constant 0 : i32
    %c0_i32_1 = arith.constant 0 : i32
    return %c0_i32, %c0_i32_0 : i32, i32
  }
  func.func @transform_2(%arg0: i32, %arg1: i32) -> (i32, i32, i32) {
    %c0_i32 = arith.constant 0 : i32
    %c0_i32_0 = arith.constant 0 : i32
    %c0_i32_1 = arith.constant 0 : i32
    return %arg0, %c0_i32, %c0_i32_0 : i32, i32, i32
  }
}

</mosaic_0001>

<llo_original>
// kernel: tpu_custom_call.1
$region0: #{tpu_custom_call.1}
  #allocation0 [shape = 'u32[]', space=smem, size = 0x4, offset = 0x4, fixed_abs, tag = 'smem constant byte address 0x4 - core index']
  #allocation1 [shape = 'u32[72,128]{1,0:T(1,128)}', space=vmem, size = 0x9000, scoped, tag = 'internal scratch']
  #allocation2 [shape = 'f32[3,640]{1,0:T(4,128)}', space=vmem, size = 0x2800, scoped, tag = 'scratch operand']
  #allocation3 [shape = 'f32[3,1]{1,0:T(4,128)}', space=vmem, size = 0x800, scoped, tag = 'scratch operand']
  #allocation4 [shape = 'f32[3,1]{1,0:T(4,128)}', space=vmem, size = 0x800, scoped, tag = 'scratch operand']
  %s0 = inlined_call_operand.hbm [shape: f32[2,4,600], index: 0, kind: input, shape index: {}]
  %s1 = inlined_call_operand.hbm [shape: f32[3,4], index: 1, kind: input, shape index: {}]
  %s2 = inlined_call_operand.vmem [shape: f32[2,3,600], index: 2, kind: output, shape index: {}]
  %s3 = sld [smem:[#allocation0]]
  $region57: #{tpu_custom_call.1} parent=0
    _
  %s5 = ssub.s32 1, %s3
  %s6 = scalar_select 0, %s5, %s3
  $region1: #{tpu_custom_call.1} parent=0
    #allocation5 [shape = 'u8[20480]{0}', space=vmem, size = 0x5000, scoped, tag = 'input window, operand 0']
    #allocation6 [shape = 's32[2]{0}', space=sflag, size = 0x8, scoped, tag = 'scoped memory for tpu_custom_call.1']
    #allocation7 [shape = 'u8[2048]{0}', space=vmem, size = 0x800, scoped, tag = 'input window, operand 1, single buffered']
    #allocation8 [shape = 's32[1]{0}', space=sflag, size = 0x4, scoped, tag = 'scoped memory for tpu_custom_call.1']
    %7 = vsyncpa [#allocation6], 0
    %s8 = scalar_lea.sflag [#allocation6], 1
    %9 = vsyncpa %s8, 0
    %10 = vsyncpa [#allocation8], 0
    loop: start=0, step=1, limit=4
    $region2: #{tpu_custom_call.1} parent=1 // loop_pre_header
      _
    $region3: #{tpu_custom_call.1} parent=1 // loop_header
      %s12 = sphi 0, %s16
      %p13 = scmp.ge.s32.totalorder %s12, 4
      %s19 = sphi 0, %s31
      %s20 = sphi 0, %s27
      %s21 = sphi 0, %s19
      %s22 = sphi 0, %s20
      %s23 = sphi 0, %s21
      %s24 = sphi 0, %s22
      %s36 = sphi 0, %s38
      %s39 = sphi 0, %s36
      %s40 = sphi 0, %s39
      %s56 = sphi 0, %s40
      %s60 = sphi 0, %s60
      %s62 = sphi 0, %s60
      %s63 = sphi 0, %s62
      %s77 = sphi 0, %s63
      %s83 = sphi 0, %s85
      %s86 = sphi 0, %s83
      %s87 = sphi 0, %s86
      %s103 = sphi 0, %s87
    $region4: #{tpu_custom_call.1} parent=1 // loop_header_branch
      %15 = sbr.rel (%p13) target = $region8
    $region5: #{tpu_custom_call.1} parent=1 // loop_body
      %s17 = ssub.s32 %s12, 1
      %s18 = ssub.s32 %s12, 2
      %s25 = sadd.s32 1, %s20
      %p26 = scmp.ge.s32.totalorder %s25, 1
      %s27 = scalar_select %p26, 0, %s25
      %s28 = sadd.s32 1, %s19
      %s29 = scalar_select %p26, %s28, %s19
      %p30 = scmp.ge.s32.totalorder %s29, 2
      %s31 = scalar_select %p30, 0, %s29
      %s32 = ssub.s32 %s19, %s31
      %s33 = ssub.s32 %s20, %s27
      %s34 = sor.u32 %s32, %s33
      %p35 = scmp.eq.s32.totalorder %s34, 0
      %s37 = sadd.s32 %s36, 1
      %s38 = scalar_select %p35, %s36, %s37
      %p41 = pneg %p35
      %p42 = scmp.eq.s32.totalorder %s12, 1
      %p43 = por %p41, %p42
      %p44 = scmp.ne.s32.totalorder %s36, %s39
      %p45 = scmp.eq.s32.totalorder %s12, 0
      %p46 = por %p44, %p45
      %p47 = scmp.ne.s32.totalorder %s36, %s39
      %p48 = scmp.eq.s32.totalorder %s17, 1
      %p49 = por %p47, %p48
      %p50 = scmp.ne.s32.totalorder %s39, %s40
      %p51 = scmp.eq.s32.totalorder %s17, 0
      %p52 = por %p50, %p51
      %p53 = scmp.ne.s32.totalorder %s39, %s40
      %p54 = scmp.eq.s32.totalorder %s18, 1
      %p55 = por %p53, %p54
      %p57 = scmp.ne.s32.totalorder %s40, %s56
      %p58 = scmp.eq.s32.totalorder %s18, 0
      %p59 = por %p57, %p58
      %s61 = sadd.s32 %s60, 1
      %p64 = scmp.eq.s32.totalorder %s12, 1
      %p65 = scmp.ne.s32.totalorder %s60, %s62
      %p66 = scmp.eq.s32.totalorder %s12, 0
      %p67 = por %p65, %p66
      %p68 = scmp.ne.s32.totalorder %s60, %s62
      %p69 = scmp.eq.s32.totalorder %s17, 1
      %p70 = por %p68, %p69
      %p71 = scmp.ne.s32.totalorder %s62, %s63
      %p72 = scmp.eq.s32.totalorder %s17, 0
      %p73 = por %p71, %p72
      %p74 = scmp.ne.s32.totalorder %s62, %s63
      %p75 = scmp.eq.s32.totalorder %s18, 1
      %p76 = por %p74, %p75
      %p78 = scmp.ne.s32.totalorder %s63, %s77
      %p79 = scmp.eq.s32.totalorder %s18, 0
      %p80 = por %p78, %p79
      %s81 = ssub.s32 %s19, %s31
      %p82 = scmp.eq.s32.totalorder %s81, 0
      %s84 = sadd.s32 %s83, 1
      %s85 = scalar_select %p82, %s83, %s84
      %p88 = pneg %p82
      %p89 = scmp.eq.s32.totalorder %s12, 1
      %p90 = por %p88, %p89
      %p91 = scmp.ne.s32.totalorder %s83, %s86
      %p92 = scmp.eq.s32.totalorder %s12, 0
      %p93 = por %p91, %p92
      %p94 = scmp.ne.s32.totalorder %s83, %s86
      %p95 = scmp.eq.s32.totalorder %s17, 1
      %p96 = por %p94, %p95
      %p97 = scmp.ne.s32.totalorder %s86, %s87
      %p98 = scmp.eq.s32.totalorder %s17, 0
      %p99 = por %p97, %p98
      %p100 = scmp.ne.s32.totalorder %s86, %s87
      %p101 = scmp.eq.s32.totalorder %s18, 1
      %p102 = por %p100, %p101
      %p104 = scmp.ne.s32.totalorder %s87, %s103
      %p105 = scmp.eq.s32.totalorder %s18, 0
      %p106 = por %p104, %p105
      %p107 = scmp.le.s32.totalorder 1, %s12
      %p108 = scmp.lt.s32.totalorder %s12, 3
      %p109 = pnand %p107, %p108
      %p110 = pneg %p109
      // Predicated region
      $region9: #{tpu_custom_call.1} parent=5 // pred_check
        _
      $region10: #{tpu_custom_call.1} parent=5 // pred_check_branch
        %112 = sbr.rel (%p109) target = $region12
      $region11: #{tpu_custom_call.1} parent=5 // pred_region
        %s113 = ssub.s32 %s12, 1
        // Predicated region
        $region13: #{tpu_custom_call.1} parent=11 // pred_check
          %p114 = pneg %p73
        $region14: #{tpu_custom_call.1} parent=11 // pred_check_branch
          %116 = sbr.rel (%p114) target = $region16
        $region15: #{tpu_custom_call.1} parent=11 // pred_region
          %118 = vsyncadd [#allocation8], 0
          %s120 = sshll.u32 %s1, 4
          %s121 = int_to_ptr.hbm [resolvable:$true] %s120
          %s122 = sshll.u32 [#allocation7], 4
          %s123 = int_to_ptr.vmem [resolvable:$true] %s122
          %125 = dma.hbm_to_vmem [thread:$0]  %s121, 64, %s123, [#allocation8]
        $region16: #{tpu_custom_call.1} parent=11 // pred_fallthru
          _
      $region12: #{tpu_custom_call.1} parent=5 // pred_fallthru
        _
      %p126 = scmp.lt.s32.totalorder %s12, 2
      // Predicated region
      $region17: #{tpu_custom_call.1} parent=5 // pred_check
        %p127 = pneg %p126
      $region18: #{tpu_custom_call.1} parent=5 // pred_check_branch
        %129 = sbr.rel (%p127) target = $region20
      $region19: #{tpu_custom_call.1} parent=5 // pred_region
        // Predicated region
        $region21: #{tpu_custom_call.1} parent=19 // pred_check
          %p130 = pneg %p46
        $region22: #{tpu_custom_call.1} parent=19 // pred_check_branch
          %132 = sbr.rel (%p130) target = $region24
        $region23: #{tpu_custom_call.1} parent=19 // pred_region
          %s133 = sand.u32 %s36, 1
          %s134 = scalar_lea.sflag [#allocation6], %s133
          %s135 = sand.u32 %s36, 1
          %s136 = smul.addr %s135, 20
          %s137 = scalar_lea.vmem [#allocation5], %s136
          %s138 = smul.u32 5, %s20
          %140 = vsyncadd %s134, 0
          %s141 = smul.addr %s19, 5
          %s142 = sadd.s32 %s138, %s141
          %s143 = smul.addr %s142, 4
          %s144 = scalar_lea.hbm %s0, %s143
          %s146 = sshll.u32 %s144, 4
          %s147 = int_to_ptr.hbm [resolvable:$true] %s146
          %s148 = sshll.u32 %s137, 4
          %s149 = int_to_ptr.vmem [resolvable:$true] %s148
          %151 = dma.hbm_to_vmem [thread:$0]  %s147, 320, %s149, %s134
        $region24: #{tpu_custom_call.1} parent=19 // pred_fallthru
          _
      $region20: #{tpu_custom_call.1} parent=5 // pred_fallthru
        _
      %p152 = scmp.le.s32.totalorder 1, %s12
      %p153 = scmp.lt.s32.totalorder %s12, 3
      %p154 = pnand %p152, %p153
      %p155 = pneg %p154
      // Predicated region
      $region25: #{tpu_custom_call.1} parent=5 // pred_check
        _
      $region26: #{tpu_custom_call.1} parent=5 // pred_check_branch
        %157 = sbr.rel (%p154) target = $region28
      $region27: #{tpu_custom_call.1} parent=5 // pred_region
        %s158 = ssub.s32 %s12, 1
        %s159 = sand.u32 %s39, 1
        %s160 = scalar_lea.sflag [#allocation6], %s159
        %s161 = sand.u32 %s39, 1
        %s162 = smul.addr %s161, 20
        %s163 = scalar_lea.vmem [#allocation5], %s162
        // Predicated region
        $region29: #{tpu_custom_call.1} parent=27 // pred_check
          %p164 = pneg %p52
        $region30: #{tpu_custom_call.1} parent=27 // pred_check_branch
          %166 = sbr.rel (%p164) target = $region32
        $region31: #{tpu_custom_call.1} parent=27 // pred_region
          %168 = dma.done %s160, 320
        $region32: #{tpu_custom_call.1} parent=27 // pred_fallthru
          _
        // Predicated region
        $region33: #{tpu_custom_call.1} parent=27 // pred_check
          %p169 = pneg %p73
        $region34: #{tpu_custom_call.1} parent=27 // pred_check_branch
          %171 = sbr.rel (%p169) target = $region36
        $region35: #{tpu_custom_call.1} parent=27 // pred_region
          %173 = dma.done [#allocation8], 64
        $region36: #{tpu_custom_call.1} parent=27 // pred_fallthru
          _
        %s174 = sand.u32 %s39, 1
        %s175 = scalar_lea.sflag [#allocation6], %s174
        %s176 = sand.u32 %s39, 1
        %s177 = smul.addr %s176, 20
        %s178 = scalar_lea.vmem [#allocation5], %s177
        %p179 = pneg %p52
        %p180 = pneg %p49
        %p181 = pneg %p73
        %p182 = pneg %p70
        %p183 = pneg %p99
        %p184 = pneg %p96
        %p185 = scmp.lt.s32.totalorder %s21, 1
        %s186 = scalar_select %p185, %s21, 1
        %s187 = smul.addr %s186, 5
        %s188 = smul.addr %s187, 4
        %s189 = scalar_lea.vmem %s2, %s188
        %s190 = smul.u32 5, %s22
        %p191 = scmp.lt.s32.totalorder %s21, 1
        %s192 = scalar_select %p191, %s21, 1
        %s193 = smul.addr %s192, 5
        %s194 = smul.addr %s193, 4
        %s195 = scalar_lea.vmem %s2, %s194
        %p196 = scmp.eq.s32.totalorder %s22, 0
        // Predicated region
        $region37: #{tpu_custom_call.1} parent=27 // pred_check
          %p197 = pneg %p196
        $region38: #{tpu_custom_call.1} parent=27 // pred_check_branch
          %199 = sbr.rel (%p197) target = $region40
        $region39: #{tpu_custom_call.1} parent=27 // pred_region
          %vm200 = vcmask 2048
          %201 = vst.msk [vmem:[#allocation3] sm:$0x7] %vm200, 0.0
          %202 = vst.msk [vmem:[#allocation4] sm:$0x7] %vm200, 0.0
        $region40: #{tpu_custom_call.1} parent=27 // pred_fallthru
          _
        %v203 = vld [vmem:[#allocation7] sm:$0x7]
        %v204 = vld [vmem:[%s163] sm:$0xff]
        %v205 = vld [vmem:[%s163 + $0x8] sm:$0xff]
        %v206 = vld [vmem:[%s163 + $0x10] sm:$0xf]
        %210 = vst [vmem:[#allocation1] ss:$2 sm:$0xff] %v204
        %s211 = scalar_lea.vmem [#allocation1], 16
        %212 = vst [vmem:[%s211] ss:$2 sm:$0xff] %v205
        %s213 = scalar_lea.vmem [#allocation1], 32
        %214 = vst [vmem:[%s213] ss:$2 sm:$0xff] %v206
        %v215 = vld.sshfl [vmem:[#allocation1] sm:$0xff pattern:$0x75316420]
        %v216 = vld.sshfl [vmem:[#allocation1 + $0x8] sm:$0xff pattern:$0x75316420]
        %v217 = vld.sshfl [vmem:[#allocation1 + $0x10] sm:$0xff pattern:$0x75316420]
        %v218 = vld.sshfl [vmem:[#allocation1 + $0x18] sm:$0xff pattern:$0x75316420]
        %v219 = vld.sshfl [vmem:[#allocation1 + $0x20] sm:$0xff pattern:$0x75316420]
        %vm220 = vcmask 31744
        %v222 = vsel %vm220, %v203, 0
        %vm224 = vcmask 1043456
        %v225 = vsel %vm224, %v215, 0
        %v227 = vsel %vm224, %v216, 0
        %v229 = vsel %vm224, %v217, 0
        %v231 = vsel %vm224, %v218, 0
        %v233 = vsel %vm224, %v219, 0
        %235 = vmatpush.msra.mxu0 0.0
        %236 = vmatpush.msra.mxu0 0.0
        %237 = vmatpush.msra.mxu0 0.0
        %238 = vmatpush.msra.mxu0 0.0
        %239 = vmatpush.msra.mxu0 0.0
        %240 = vmatpush.msra.mxu0 0.0
        %241 = vmatpush.msra.mxu0 0.0
        %242 = vmatpush.msra.mxu0 0.0
        %243 = vmatpush.msra.mxu0 0.0
        %244 = vmatpush.msra.mxu0 0.0
        %245 = vmatpush.msra.mxu0 0.0
        %246 = vmatpush.msra.mxu0 0.0
        %247 = vmatpush.msra.mxu0 0.0
        %248 = vmatpush.msra.mxu0 0.0
        %249 = vmatpush.msra.mxu0 0.0
        %250 = vmatpush.msra.mxu0 %v225
        %251 = vmatmul.f32.gmra.mxu0 %v222
        %v252 = vpop.f32.mrf.mxu0
        %v253 = vadd.f32 0.0, %v252
        %254 = vdwg.mxu0
        %255 = vmatpush.msra.mxu0 0.0
        %256 = vmatpush.msra.mxu0 0.0
        %257 = vmatpush.msra.mxu0 0.0
        %258 = vmatpush.msra.mxu0 0.0
        %259 = vmatpush.msra.mxu0 0.0
        %260 = vmatpush.msra.mxu0 0.0
        %261 = vmatpush.msra.mxu0 0.0
        %262 = vmatpush.msra.mxu0 0.0
        %263 = vmatpush.msra.mxu0 0.0
        %264 = vmatpush.msra.mxu0 0.0
        %265 = vmatpush.msra.mxu0 0.0
        %266 = vmatpush.msra.mxu0 0.0
        %267 = vmatpush.msra.mxu0 0.0
        %268 = vmatpush.msra.mxu0 0.0
        %269 = vmatpush.msra.mxu0 0.0
        %270 = vmatpush.msra.mxu0 %v227
        %271 = vmatmul.f32.gmra.mxu0 %v222
        %v272 = vpop.f32.mrf.mxu0
        %v273 = vadd.f32 0.0, %v272
        %274 = vdwg.mxu0
        %275 = vmatpush.msra.mxu0 0.0
        %276 = vmatpush.msra.mxu0 0.0
        %277 = vmatpush.msra.mxu0 0.0
        %278 = vmatpush.msra.mxu0 0.0
        %279 = vmatpush.msra.mxu0 0.0
        %280 = vmatpush.msra.mxu0 0.0
        %281 = vmatpush.msra.mxu0 0.0
        %282 = vmatpush.msra.mxu0 0.0
        %283 = vmatpush.msra.mxu0 0.0
        %284 = vmatpush.msra.mxu0 0.0
        %285 = vmatpush.msra.mxu0 0.0
        %286 = vmatpush.msra.mxu0 0.0
        %287 = vmatpush.msra.mxu0 0.0
        %288 = vmatpush.msra.mxu0 0.0
        %289 = vmatpush.msra.mxu0 0.0
        %290 = vmatpush.msra.mxu0 %v229
        %291 = vmatmul.f32.gmra.mxu0 %v222
        %v292 = vpop.f32.mrf.mxu0
        %v293 = vadd.f32 0.0, %v292
        %294 = vdwg.mxu0
        %295 = vmatpush.msra.mxu0 0.0
        %296 = vmatpush.msra.mxu0 0.0
        %297 = vmatpush.msra.mxu0 0.0
        %298 = vmatpush.msra.mxu0 0.0
        %299 = vmatpush.msra.mxu0 0.0
        %300 = vmatpush.msra.mxu0 0.0
        %301 = vmatpush.msra.mxu0 0.0
        %302 = vmatpush.msra.mxu0 0.0
        %303 = vmatpush.msra.mxu0 0.0
        %304 = vmatpush.msra.mxu0 0.0
        %305 = vmatpush.msra.mxu0 0.0
        %306 = vmatpush.msra.mxu0 0.0
        %307 = vmatpush.msra.mxu0 0.0
        %308 = vmatpush.msra.mxu0 0.0
        %309 = vmatpush.msra.mxu0 0.0
        %310 = vmatpush.msra.mxu0 %v231
        %311 = vmatmul.f32.gmra.mxu0 %v222
        %v312 = vpop.f32.mrf.mxu0
        %v313 = vadd.f32 0.0, %v312
        %314 = vdwg.mxu0
        %315 = vmatpush.msra.mxu0 0.0
        %316 = vmatpush.msra.mxu0 0.0
        %317 = vmatpush.msra.mxu0 0.0
        %318 = vmatpush.msra.mxu0 0.0
        %319 = vmatpush.msra.mxu0 0.0
        %320 = vmatpush.msra.mxu0 0.0
        %321 = vmatpush.msra.mxu0 0.0
        %322 = vmatpush.msra.mxu0 0.0
        %323 = vmatpush.msra.mxu0 0.0
        %324 = vmatpush.msra.mxu0 0.0
        %325 = vmatpush.msra.mxu0 0.0
        %326 = vmatpush.msra.mxu0 0.0
        %327 = vmatpush.msra.mxu0 0.0
        %328 = vmatpush.msra.mxu0 0.0
        %329 = vmatpush.msra.mxu0 0.0
        %330 = vmatpush.msra.mxu0 %v233
        %331 = vmatmul.f32.gmra.mxu0 %v222
        %v332 = vpop.f32.mrf.mxu0
        %v333 = vadd.f32 0.0, %v332
        %334 = vdwg.mxu0
        %v335 = vlaneseq
        %v336 = vand.u32 %v335, 127
        %v337 = vadd.s32 %v336, 128
        %v338 = vadd.s32 %v336, 256
        %v339 = vadd.s32 %v336, 384
        %v340 = vadd.s32 %v336, 512
        %s341 = smul.u32 %s22, 640
        %v342 = vstv %s341
        %v343 = vadd.s32 %v336, %v342
        %v344 = vadd.s32 %v337, %v342
        %v345 = vadd.s32 %v338, %v342
        %v346 = vadd.s32 %v339, %v342
        %v347 = vadd.s32 %v340, %v342
        %vm348 = vcmp.lt.s32.totalorder %v343, 600
        %vm349 = vcmp.lt.s32.totalorder %v344, 600
        %vm350 = vcmp.lt.s32.totalorder %v345, 600
        %vm351 = vcmp.lt.s32.totalorder %v346, 600
        %vm352 = vcmp.lt.s32.totalorder %v347, 600
        %v353 = vsel %vm348, %v253, 0.0
        %v354 = vsel %vm349, %v273, 0.0
        %v355 = vsel %vm350, %v293, 0.0
        %v356 = vsel %vm351, %v313, 0.0
        %v357 = vsel %vm352, %v333, 0.0
        %v358 = vld [vmem:[#allocation3] sm:$0x7]
        %vm359 = vcmask 1042432
        %v360 = vsel %vm359, %v353, 0.0
        %v361 = vsel %vm359, %v354, 0.0
        %v362 = vadd.f32 %v360, %v361
        %v363 = vsel %vm359, %v355, 0.0
        %v364 = vadd.f32 %v362, %v363
        %v365 = vsel %vm359, %v356, 0.0
        %v366 = vadd.f32 %v364, %v365
        %v367 = vsel %vm359, %v357, 0.0
        %v368 = vadd.f32 %v366, %v367
        %369 = vadd.xlane.f32.xlu0 %v368
        %v370 = vpop.xlane.xlu0 %369
        %v371 = vadd.f32 %v358, %v370
        %vm372 = vcmask 2048
        %373 = vst.msk [vmem:[#allocation3] sm:$0x7] %vm372, %v371
        %v374 = vld [vmem:[#allocation4] sm:$0x7]
        %v375 = vmul.f32 %v353, %v353
        %v376 = vmul.f32 %v354, %v354
        %v377 = vmul.f32 %v355, %v355
        %v378 = vmul.f32 %v356, %v356
        %v379 = vmul.f32 %v357, %v357
        %v380 = vsel %vm359, %v375, 0.0
        %v381 = vsel %vm359, %v376, 0.0
        %v382 = vadd.f32 %v380, %v381
        %v383 = vsel %vm359, %v377, 0.0
        %v384 = vadd.f32 %v382, %v383
        %v385 = vsel %vm359, %v378, 0.0
        %v386 = vadd.f32 %v384, %v385
        %v387 = vsel %vm359, %v379, 0.0
        %v388 = vadd.f32 %v386, %v387
        %389 = vadd.xlane.f32.xlu0 %v388
        %v390 = vpop.xlane.xlu0 %389
        %v391 = vadd.f32 %v374, %v390
        %392 = vst.msk [vmem:[#allocation4] sm:$0x7] %vm372, %v391
        %v397 = vrot.slane %v354, 4
        %v398 = vrot.slane %v356, 4
        %v399 = vsel %vm224, %v353, %v397
        %v400 = vsel %vm224, %v355, %v398
        %s403 = sshra.s32 %s341, 7
        %s404 = sand.u32 %s341, 127
        %s405 = smul.addr %s403, 4
        %s406 = scalar_lea.vmem [#allocation2], %s405
        %407 = vst [vmem:[%s406] sm:$0x77] %v399
        %408 = vst [vmem:[%s406 + $0x8] sm:$0x77] %v400
        %409 = vst [vmem:[%s406 + $0x10] sm:$0x7] %v357
        // Predicated region
        $region41: #{tpu_custom_call.1} parent=27 // pred_check
          %p410 = pneg %p196
        $region42: #{tpu_custom_call.1} parent=27 // pred_check_branch
          %412 = sbr.rel (%p410) target = $region44
        $region43: #{tpu_custom_call.1} parent=27 // pred_region
          %v413 = vld [vmem:[#allocation3] sm:$0x7]
          %v414 = vmul.f32 %v413, 0.0016666667
          %v415 = vld [vmem:[#allocation4] sm:$0x7]
          %v416 = vmul.f32 %v415, 0.0016666667
          %v417 = vmul.f32 %v414, %v414
          %v418 = vsub.f32 %v416, %v417
          %v419 = vmax.f32 %v418, 0.0
          %v420 = vadd.f32 %v419, 1e-05
          %v421 = vrsqrt.pop %v420
          %v422 = vmul.f32 %v421, %v420
          %v423 = vmul.f32 %v422, %v421
          %v424 = vmul.f32 0.5, %v423
          %v425 = vsub.f32 1.5, %v424
          %v426 = vmul.f32 %v421, %v425
          %vm427 = vweird.f32 %v420
          %vm428 = vweird.f32 %v421
          %vm429 = vmor %vm427, %vm428
          %v430 = vsel %vm429, %v421, %v426
          %v431 = vsub.f32 0.0, %v414
          %v432 = vmul.f32 %v431, %v430
          %v433 = vld [vmem:[#allocation2] sm:$0x77]
          %v434 = vld [vmem:[#allocation2 + $0x8] sm:$0x77]
          %v435 = vld [vmem:[#allocation2 + $0x10] sm:$0x7]
          %437 = vset.pattern.permute.xlu0 0
          %438 = vperm.xlu0 %437, %v430
          %v439 = vpop.permute.xlu0 %438
          %v441 = vunpack.c.l.s4 839922192
          %v442 = vunpack.c.0.s8 %v441
          %v443 = vperm.slane %v439, %v442
          %v445 = vmul.f32 %v433, %v443
          %v446 = vmul.f32 %v434, %v443
          %v447 = vmul.f32 %v435, %v443
          %449 = vset.pattern.permute.xlu0 0
          %450 = vperm.xlu0 %449, %v432
          %v451 = vpop.permute.xlu0 %450
          %v453 = vunpack.c.l.s4 839922192
          %v454 = vunpack.c.0.s8 %v453
          %v455 = vperm.slane %v451, %v454
          %v457 = vadd.f32 %v445, %v455
          %v458 = vadd.f32 %v446, %v455
          %v459 = vadd.f32 %v447, %v455
          %v460 = vmax.f32 %v457, 0.0
          %v461 = vmax.f32 %v458, 0.0
          %v462 = vmax.f32 %v459, 0.0
          %463 = vst [vmem:[%s195] sm:$0x77] %v460
          %464 = vst [vmem:[%s195 + $0x8] sm:$0x77] %v461
          %vm465 = vcmask 714752
          %466 = vst.msk [vmem:[%s195 + $0x10] sm:$0x7] %vm465, %v462
        $region44: #{tpu_custom_call.1} parent=27 // pred_fallthru
          _
        %p467 = scmp.lt.s32.totalorder %s21, 1
        %s468 = scalar_select %p467, %s21, 1
        %s469 = smul.addr %s468, 5
        %s470 = smul.addr %s469, 4
        %s471 = scalar_lea.vmem %s2, %s470
        // Predicated region
        $region45: #{tpu_custom_call.1} parent=27 // pred_check
          %p472 = pneg %p96
        $region46: #{tpu_custom_call.1} parent=27 // pred_check_branch
          %474 = sbr.rel (%p472) target = $region48
        $region47: #{tpu_custom_call.1} parent=27 // pred_region
          _
        $region48: #{tpu_custom_call.1} parent=27 // pred_fallthru
          _
      $region28: #{tpu_custom_call.1} parent=5 // pred_fallthru
        _
      %p475 = scmp.le.s32.totalorder 2, %s12
      // Predicated region
      $region49: #{tpu_custom_call.1} parent=5 // pred_check
        %p476 = pneg %p475
      $region50: #{tpu_custom_call.1} parent=5 // pred_check_branch
        %478 = sbr.rel (%p476) target = $region52
      $region51: #{tpu_custom_call.1} parent=5 // pred_region
        %s479 = ssub.s32 %s12, 2
        // Predicated region
        $region53: #{tpu_custom_call.1} parent=51 // pred_check
          %p480 = pneg %p102
        $region54: #{tpu_custom_call.1} parent=51 // pred_check_branch
          %482 = sbr.rel (%p480) target = $region56
        $region55: #{tpu_custom_call.1} parent=51 // pred_region
          %p483 = scmp.lt.s32.totalorder %s23, 1
          %s484 = scalar_select %p483, %s23, 1
          %s485 = smul.addr %s484, 5
          %s486 = smul.addr %s485, 4
          %s487 = scalar_lea.vmem %s2, %s486
        $region56: #{tpu_custom_call.1} parent=51 // pred_fallthru
          _
      $region52: #{tpu_custom_call.1} parent=5 // pred_fallthru
        _
    $region6: #{tpu_custom_call.1} parent=1 // loop_footer
      %s16 = sadd.s32 1, %s12
    $region7: #{tpu_custom_call.1} parent=1 // loop_footer_branch
      %11 = sbr.rel target = $region3
    $region8: #{tpu_custom_call.1} parent=1 // loop_exit
      _
    %488 = vsyncpa [#allocation6], 1
    %s489 = scalar_lea.sflag [#allocation6], 1
    %490 = vsyncpa %s489, 1
    %491 = vsyncpa [#allocation8], 1

</llo_original>
